<compile_context>
chip_gen: v7x
topology: tpu7x:2x2x1
jax: 0.10.0
libtpu: 0.0.40
codegen_flags: <defaults>
</compile_context>

<pallas_src>
import jax
import jax.numpy as jnp
import numpy as np
from jax.experimental import pallas as pl
from jax.experimental.pallas import tpu as pltpu

KERNEL_SIZES = (3, 4, 5)


def _round_up(x, m):
    return ((x + m - 1) // m) * m


def cnn_text_kernel(emb_ref, wconv_ref, biasmask_ref, wfc_ref, bfc_ref, out_ref):
    """One block of batch rows per grid step.

    emb_ref     : (Bb*Lp, E)   compute-dtype embedded tokens, batch-major flat
    wconv_ref   : (Kmax*E, 3F) fused im2col conv weight (zero-padded taps)
    biasmask_ref: (Lp, 3F) f32 conv bias with -1e30 at invalid time positions
    wfc_ref     : (3F, Cp) f32 final Linear weight (transposed, lane-padded)
    bfc_ref     : (1, Cp)  f32 final Linear bias (lane-padded)
    out_ref     : (Bb, Cp) f32 logits (padded columns sliced off by the host)
    """
    x = emb_ref[...]                                     # (N, E) compute dtype
    n_rows, e_dim = x.shape
    lp, f3 = biasmask_ref.shape
    bb = n_rows // lp
    k_max = wconv_ref.shape[0] // e_dim

    # im2col: tap u holds x shifted "up" by u rows, i.e. flat row i sees
    # emb[i + u].  Rows whose window crosses a row/padding boundary read
    # garbage here and are killed by the -1e30 bias before the max-pool.
    # The sublane shift runs on a transient f32 view (Mosaic rotate is
    # 32-bit); taps are cast straight back so x_cat stays in compute dtype.
    # TODO(synk): move the roll itself to bf16 once packed sublane rotates
    # lower cleanly; everything downstream is already narrow.
    x32 = x if x.dtype == jnp.float32 else x.astype(jnp.float32)
    taps = [x]
    for u in range(1, k_max):
        taps.append(pltpu.roll(x32, shift=n_rows - u, axis=0).astype(x.dtype))
    x_cat = jnp.concatenate(taps, axis=-1)               # (N, Kmax*E)

    # All three convolutions in one MXU matmul, f32 accumulation.
    conv = jnp.dot(x_cat, wconv_ref[...], preferred_element_type=jnp.float32)

    # bias (with -1e30 at masked time positions) + ReLU + global max-pool.
    # ReLU clamps masked positions to 0 and every filter group has at least
    # one valid position, so the pool is exact.
    conv = jnp.maximum(conv.reshape(bb, lp, f3) + biasmask_ref[...][None, :, :],
                       0.0)
    feat = jnp.max(conv, axis=1)                         # (Bb, 3F) f32

    # dropout(0.5) is identity in eval mode.  Final Linear (lane-padded Cp).
    logits = jnp.dot(feat, wfc_ref[...], preferred_element_type=jnp.float32)
    out_ref[...] = (logits + bfc_ref[...]).astype(out_ref.dtype)


def cnn_text_classifier(emb, conv_ws, conv_bs, w_fc, b_fc, *,
                        kernel_sizes=KERNEL_SIZES, block_batch=None,
                        compute_dtype=jnp.bfloat16):
    """emb: (B, L, E) embedded tokens (any float dtype).

    conv_ws[i]: (k_i, E, F) per-tap conv matrices
                (from PyTorch Conv2d weight (F,1,k,E): w[:, 0].transpose(1, 2, 0)).
    conv_bs[i]: (1, F).  w_fc: (3F, C) (PyTorch fc.weight transposed).  b_fc: (1, C).
    """
    B, L, E = emb.shape
    k_max = max(kernel_sizes)
    assert L >= k_max, "sequence length must be >= the largest kernel size"
    F = conv_ws[0].shape[-1]
    F3 = len(kernel_sizes) * F
    C = w_fc.shape[-1]
    C_pad = _round_up(C, 128)            # lane-dense FC / output columns
    Lp = _round_up(L, 8)                 # sublane-aligned sequence length
    itemsize = np.dtype(compute_dtype).itemsize

    # --- VMEM-aware block sizing (bytes per flat row of Bb*Lp) -------------
    #   emb block (double-buffered)  : 2 * E * itemsize
    #   x_cat                        : k_max * E * itemsize
    #   transient f32 roll view      : 4 * E
    #   conv f32 (~2 live copies)    : 8 * F3
    # Budget ~20 MiB so the tile fits v7x's 64 MiB VMEM (32 MiB scoped default)
    # as well as v5e/v6e; weights are small and constant-indexed.
    bytes_per_row = 2 * E * itemsize + k_max * E * itemsize + 4 * E + 8 * F3
    max_rows = max((20 * 1024 * 1024) // bytes_per_row, Lp)
    if block_batch is None:
        rows_cap = max(max_rows // Lp, 1)        # VMEM cap, in batch rows
        two_blocks = max(B // 2, 1)              # >= 2 grid steps when B allows
        block_batch = min(two_blocks, rows_cap)  # (feeds both v7x TensorCores)
    block_batch = max(8, (int(block_batch) // 8) * 8)   # multiple of 8 sublanes
    n_blocks = pl.cdiv(B, block_batch)
    B_pad = n_blocks * block_batch

    # --- host-side layout plumbing (done once; weights stay VMEM-resident) --
    emb_c = emb.astype(compute_dtype)
    if B_pad != B or Lp != L:
        emb_c = jnp.pad(emb_c, ((0, B_pad - B), (0, Lp - L), (0, 0)))
    emb_flat = emb_c.reshape(B_pad * Lp, E)

    # Fused im2col conv weight: zero-pad the taps a kernel size does not use.
    w_fused = jnp.zeros((k_max * E, F3), jnp.float32)
    for g, (k, w) in enumerate(zip(kernel_sizes, conv_ws)):
        w_fused = w_fused.at[:k * E, g * F:(g + 1) * F].set(
            w.astype(jnp.float32).reshape(k * E, F))
    w_fused = w_fused.astype(compute_dtype)

    # Conv bias with the time-validity mask folded in: invalid positions get
    # -1e30 so ReLU clamps them to 0 before the max-pool (no mask multiply,
    # no 0*Inf hazard).
    t = jnp.arange(Lp)[:, None]
    bias_mask = jnp.concatenate(
        [jnp.where(t < (L - k + 1), b.reshape(1, F).astype(jnp.float32),
                   jnp.float32(-1e30))
         for k, b in zip(kernel_sizes, conv_bs)], axis=1)          # (Lp, 3F)

    # FC weight/bias zero-padded to a full 128-lane output width; kept in f32
    # (feat is already f32 and this matmul is tiny).
    w_fc_p = jnp.zeros((F3, C_pad), jnp.float32).at[:, :C].set(
        w_fc.astype(jnp.float32))
    b_fc_p = jnp.zeros((1, C_pad), jnp.float32).at[:, :C].set(
        b_fc.reshape(1, C).astype(jnp.float32))

    rows_per_block = block_batch * Lp
    out = pl.pallas_call(
        cnn_text_kernel,
        out_shape=jax.ShapeDtypeStruct((B_pad, C_pad), jnp.float32),
        grid=(n_blocks,),
        in_specs=[
            pl.BlockSpec((rows_per_block, E), lambda i: (i, 0)),
            # Constant-index weights/bias/mask: VMEM-resident across steps.
            # TODO(synk): mark these pl.Buffered(1) on v7x to skip the unused
            # second pipeline buffer (negligible on 128 MiB parts).
            pl.BlockSpec(w_fused.shape, lambda i: (0, 0)),
            pl.BlockSpec(bias_mask.shape, lambda i: (0, 0)),
            pl.BlockSpec(w_fc_p.shape, lambda i: (0, 0)),
            pl.BlockSpec(b_fc_p.shape, lambda i: (0, 0)),
        ],
        out_specs=pl.BlockSpec((block_batch, C_pad), lambda i: (i, 0)),
        compiler_params=pltpu.CompilerParams(
            dimension_semantics=("parallel",),
            vmem_limit_bytes=48 * 1024 * 1024),
    )(emb_flat, w_fused, bias_mask, w_fc_p, b_fc_p)
    return out[:B, :C]


if __name__ == "__main__":
    # Small, module-consistent shapes.
    V, E, C, F = 50, 32, 4, 32          # vocab, embed_dim, num_classes, num_filters
    B, L = 16, 16                       # batch, sequence length (2 grid blocks of 8)

    key = jax.random.PRNGKey(0)
    ks = jax.random.split(key, 10)

    # Deterministic synthetic parameters (same shapes as the nn.Module's params,
    # re-laid-out for the kernel).
    embedding = jax.random.normal(ks[0], (V, E), jnp.float32) * 0.1
    conv_ws, conv_bs = [], []
    for i, k in enumerate(KERNEL_SIZES):
        # PyTorch Conv2d weight is (F, 1, k, E); kernel layout is (k, E, F).
        conv_ws.append(jax.random.normal(ks[1 + i], (k, E, F), jnp.float32) * 0.1)
        conv_bs.append(jax.random.normal(ks[4 + i], (1, F), jnp.float32) * 0.1)
    # PyTorch Linear weight is (C, 3F); kernel layout is the transpose (3F, C).
    w_fc = jax.random.normal(ks[7], (len(KERNEL_SIZES) * F, C), jnp.float32) * 0.1
    b_fc = jax.random.normal(ks[8], (1, C), jnp.float32) * 0.1

    # Input token ids, shape (B, L) — matches the module's forward input.
    tokens = jax.random.randint(ks[9], (B, L), 0, V)

    # TODO(synk): nn.Embedding gather stays in plain JAX/XLA glue; done in
    # bf16 so the pre-kernel pad/cast pass moves half the HBM bytes.
    emb = embedding.astype(jnp.bfloat16)[tokens]          # (B, L, E) bf16

    out = cnn_text_classifier(emb, conv_ws, conv_bs, w_fc, b_fc)
    out = jax.block_until_ready(out)

    # Pure-JAX f32 reference (exact PyTorch eval-mode forward semantics),
    # computed from the same (bf16-quantized) embeddings.
    def ref_forward(emb_f32):
        feats = []
        for k, w, bias in zip(KERNEL_SIZES, conv_ws, conv_bs):
            T = L - k + 1
            acc = jnp.zeros((B, T, F), jnp.float32)
            for u in range(k):
                acc = acc + jnp.einsum('bte,ef->btf', emb_f32[:, u:u + T, :], w[u])
            acc = jnp.maximum(acc + bias[None], 0.0)
            feats.append(jnp.max(acc, axis=1))
        feat = jnp.concatenate(feats, axis=1)
        return feat @ w_fc + b_fc

    ref = ref_forward(emb.astype(jnp.float32))
    assert out.shape == (B, C)
    # bf16 conv/FC weights + f32 accumulation vs pure-f32 reference.
    assert np.allclose(np.asarray(out), np.asarray(ref), atol=2e-2, rtol=2e-2)
    print("KERNEL_OK")
</pallas_src>

<mosaic_0001>
module attributes {stable_mosaic.version = 11 : i64} {
  func.func @cnn_text_kernel(%arg0: i32, %arg1: memref<128x32xbf16, #tpu.memory_space<vmem>>, %arg2: memref<160x96xbf16, #tpu.memory_space<vmem>>, %arg3: memref<16x96xf32, #tpu.memory_space<vmem>>, %arg4: memref<96x128xf32, #tpu.memory_space<vmem>>, %arg5: memref<1x128xf32, #tpu.memory_space<vmem>>, %arg6: memref<8x128xf32, #tpu.memory_space<vmem>>) attributes {dimension_semantics = [#tpu.dimension_semantics<parallel>], iteration_bounds = array<i64: 2>, scalar_prefetch = 0 : i64, scratch_operands = 0 : i64, tpu.core_type = #tpu.core_type<tc>, window_params = [{transform_indices = @transform_0, window_bounds = array<i64: 128, 32>}, {pipeline_mode = #tpu.pipeline_mode<synchronous>, transform_indices = @transform_1, window_bounds = array<i64: 160, 96>}, {pipeline_mode = #tpu.pipeline_mode<synchronous>, transform_indices = @transform_2, window_bounds = array<i64: 16, 96>}, {pipeline_mode = #tpu.pipeline_mode<synchronous>, transform_indices = @transform_3, window_bounds = array<i64: 96, 128>}, {pipeline_mode = #tpu.pipeline_mode<synchronous>, transform_indices = @transform_4, window_bounds = array<i64: 1, 128>}, {transform_indices = @transform_5, window_bounds = array<i64: 8, 128>}]} {
    %c0 = arith.constant 0 : index
    %c0_0 = arith.constant 0 : index
    %0 = vector.load %arg1[%c0, %c0_0] : memref<128x32xbf16, #tpu.memory_space<vmem>>, vector<128x32xbf16>
    %1 = arith.extf %0 : vector<128x32xbf16> to vector<128x32xf32>
    %c127_i32 = arith.constant 127 : i32
    %2 = tpu.dynamic_rotate %1 by %c127_i32 dim 0 : vector<128x32xf32>, i32 -> vector<128x32xf32>
    %3 = arith.truncf %2 : vector<128x32xf32> to vector<128x32xbf16>
    %c126_i32 = arith.constant 126 : i32
    %4 = tpu.dynamic_rotate %1 by %c126_i32 dim 0 : vector<128x32xf32>, i32 -> vector<128x32xf32>
    %5 = arith.truncf %4 : vector<128x32xf32> to vector<128x32xbf16>
    %c125_i32 = arith.constant 125 : i32
    %6 = tpu.dynamic_rotate %1 by %c125_i32 dim 0 : vector<128x32xf32>, i32 -> vector<128x32xf32>
    %7 = arith.truncf %6 : vector<128x32xf32> to vector<128x32xbf16>
    %c124_i32 = arith.constant 124 : i32
    %8 = tpu.dynamic_rotate %1 by %c124_i32 dim 0 : vector<128x32xf32>, i32 -> vector<128x32xf32>
    %9 = arith.truncf %8 : vector<128x32xf32> to vector<128x32xbf16>
    %10 = tpu.concatenate %0, %3, %5, %7, %9 in 1 : vector<128x32xbf16>, vector<128x32xbf16>, vector<128x32xbf16>, vector<128x32xbf16>, vector<128x32xbf16> -> vector<128x160xbf16>
    %c0_1 = arith.constant 0 : index
    %c0_2 = arith.constant 0 : index
    %11 = vector.load %arg2[%c0_1, %c0_2] : memref<160x96xbf16, #tpu.memory_space<vmem>>, vector<160x96xbf16>
    %cst = arith.constant dense<0.000000e+00> : vector<128x96xf32>
    %12 = tpu.matmul %10, %11, %cst {dimension_numbers = #tpu.dot_dimension_numbers<[1], [0], [0], [1], [0, 0, 1, 1], [], []>} : vector<128x160xbf16>, vector<160x96xbf16>, vector<128x96xf32> -> vector<128x96xf32>
    %13 = vector.shape_cast %12 : vector<128x96xf32> to vector<8x16x96xf32>
    %c0_3 = arith.constant 0 : index
    %c0_4 = arith.constant 0 : index
    %14 = vector.load %arg3[%c0_3, %c0_4] : memref<16x96xf32, #tpu.memory_space<vmem>>, vector<16x96xf32>
    %15 = vector.shape_cast %14 : vector<16x96xf32> to vector<1x16x96xf32>
    %16 = vector.broadcast %15 : vector<1x16x96xf32> to vector<8x16x96xf32>
    %17 = arith.addf %13, %16 : vector<8x16x96xf32>
    %cst_5 = arith.constant 0.000000e+00 : f32
    %18 = vector.broadcast %cst_5 : f32 to vector<8x16x96xf32>
    %19 = arith.maximumf %17, %18 : vector<8x16x96xf32>
    %cst_6 = arith.constant dense<0xFF800000> : vector<8x96xf32>
    %20 = vector.multi_reduction <maximumf>, %19, %cst_6 [1] : vector<8x16x96xf32> to vector<8x96xf32>
    %c0_7 = arith.constant 0 : index
    %c0_8 = arith.constant 0 : index
    %21 = vector.load %arg4[%c0_7, %c0_8] : memref<96x128xf32, #tpu.memory_space<vmem>>, vector<96x128xf32>
    %cst_9 = arith.constant dense<0.000000e+00> : vector<8x128xf32>
    %22 = tpu.matmul %20, %21, %cst_9 {dimension_numbers = #tpu.dot_dimension_numbers<[1], [0], [0], [1], [0, 0, 1, 1], [], []>} : vector<8x96xf32>, vector<96x128xf32>, vector<8x128xf32> -> vector<8x128xf32>
    %c0_10 = arith.constant 0 : index
    %c0_11 = arith.constant 0 : index
    %23 = vector.load %arg5[%c0_10, %c0_11] : memref<1x128xf32, #tpu.memory_space<vmem>>, vector<1x128xf32>
    %24 = vector.broadcast %23 : vector<1x128xf32> to vector<8x128xf32>
    %25 = arith.addf %22, %24 : vector<8x128xf32>
    %c0_12 = arith.constant 0 : index
    %c0_13 = arith.constant 0 : index
    %26 = vector.load %arg6[%c0_12, %c0_13] : memref<8x128xf32, #tpu.memory_space<vmem>>, vector<8x128xf32>
    tpu.vector_store %arg6[%c0_12, %c0_13], %25 {strides = array<i32>} : memref<8x128xf32, #tpu.memory_space<vmem>>, vector<8x128xf32>,
    return
  }
  func.func @transform_0(%arg0: i32) -> (i32, i32) {
    %c0_i32 = arith.constant 0 : i32
    %c0_i32_0 = arith.constant 0 : i32
    return %arg0, %c0_i32 : i32, i32
  }
  func.func @transform_1(%arg0: i32) -> (i32, i32) {
    %c0_i32 = arith.constant 0 : i32
    %c0_i32_0 = arith.constant 0 : i32
    %c0_i32_1 = arith.constant 0 : i32
    return %c0_i32, %c0_i32_0 : i32, i32
  }
  func.func @transform_2(%arg0: i32) -> (i32, i32) {
    %c0_i32 = arith.constant 0 : i32
    %c0_i32_0 = arith.constant 0 : i32
    %c0_i32_1 = arith.constant 0 : i32
    return %c0_i32, %c0_i32_0 : i32, i32
  }
  func.func @transform_3(%arg0: i32) -> (i32, i32) {
    %c0_i32 = arith.constant 0 : i32
    %c0_i32_0 = arith.constant 0 : i32
    %c0_i32_1 = arith.constant 0 : i32
    return %c0_i32, %c0_i32_0 : i32, i32
  }
  func.func @transform_4(%arg0: i32) -> (i32, i32) {
    %c0_i32 = arith.constant 0 : i32
    %c0_i32_0 = arith.constant 0 : i32
    %c0_i32_1 = arith.constant 0 : i32
    return %c0_i32, %c0_i32_0 : i32, i32
  }
  func.func @transform_5(%arg0: i32) -> (i32, i32) {
    %c0_i32 = arith.constant 0 : i32
    %c0_i32_0 = arith.constant 0 : i32
    return %arg0, %c0_i32 : i32, i32
  }
}

</mosaic_0001>

<llo_original>
// kernel: tpu_custom_call.1
$region0: #{tpu_custom_call.1}
  #allocation0 [shape = 'u32[]', space=smem, size = 0x4, offset = 0x4, fixed_abs, tag = 'smem constant byte address 0x4 - core index']
  #allocation1 [shape = 'u32[144,128]{1,0:T(1,128)}', space=vmem, size = 0x12000, scoped, tag = 'internal scratch']
  %s0 = inlined_call_operand.vmem [shape: bf16[256,32], index: 0, kind: input, shape index: {}]
  %s1 = inlined_call_operand.hbm [shape: bf16[160,96], index: 1, kind: input, shape index: {}]
  %s2 = inlined_call_operand.vmem [shape: f32[16,96], index: 2, kind: input, shape index: {}]
  %s3 = inlined_call_operand.vmem [shape: f32[96,128], index: 3, kind: input, shape index: {}]
  %s4 = inlined_call_operand.vmem [shape: f32[1,128], index: 4, kind: input, shape index: {}]
  %s5 = inlined_call_operand.hbm [shape: f32[16,128], index: 5, kind: output, shape index: {}]
  %s6 = sld [smem:[#allocation0]]
  $region57: #{tpu_custom_call.1} parent=0
    _
  %s8 = ssub.s32 1, %s6
  %s9 = scalar_select 0, %s8, %s6
  $region1: #{tpu_custom_call.1} parent=0
    #allocation2 [shape = 'u8[40960]{0}', space=vmem, size = 0xa000, scoped, tag = 'input window, operand 1, single buffered']
    #allocation3 [shape = 's32[2]{0}', space=sflag, size = 0x8, scoped, tag = 'scoped memory for tpu_custom_call.1']
    #allocation4 [shape = 's32[2]{0}', space=sflag, size = 0x8, scoped, tag = 'scoped memory for tpu_custom_call.1']
    #allocation5 [shape = 'u8[8192]{0}', space=vmem, size = 0x2000, scoped, tag = 'output window, operand 0']
    %10 = vsyncpa [#allocation3], 0
    %11 = vsyncpa [#allocation4], 0
    %s12 = scalar_lea.sflag [#allocation4], 1
    %13 = vsyncpa %s12, 0
    loop: start=0, step=1, limit=4
    $region2: #{tpu_custom_call.1} parent=1 // loop_pre_header
      _
    $region3: #{tpu_custom_call.1} parent=1 // loop_header
      %s15 = sphi 0, %s19
      %p16 = scmp.ge.s32.totalorder %s15, 4
      %s25 = sphi 0, %s27
      %s28 = sphi 0, %s25
      %s29 = sphi 0, %s28
      %s45 = sphi 0, %s29
      %s49 = sphi 0, %s49
      %s51 = sphi 0, %s49
      %s52 = sphi 0, %s51
      %s66 = sphi 0, %s52
      %s70 = sphi 0, %s70
      %s72 = sphi 0, %s70
      %s73 = sphi 0, %s72
      %s87 = sphi 0, %s73
      %s91 = sphi 0, %s91
      %s93 = sphi 0, %s91
      %s94 = sphi 0, %s93
      %s108 = sphi 0, %s94
      %s112 = sphi 0, %s112
      %s114 = sphi 0, %s112
      %s115 = sphi 0, %s114
      %s129 = sphi 0, %s115
      %s135 = sphi 0, %s137
      %s138 = sphi 0, %s135
      %s139 = sphi 0, %s138
      %s155 = sphi 0, %s139
    $region4: #{tpu_custom_call.1} parent=1 // loop_header_branch
      %18 = sbr.rel (%p16) target = $region8
    $region5: #{tpu_custom_call.1} parent=1 // loop_body
      %s20 = ssub.s32 %s15, 1
      %s21 = ssub.s32 %s15, 2
      %s22 = sadd.s32 %s15, 1
      %s23 = ssub.s32 %s15, %s22
      %p24 = scmp.eq.s32.totalorder %s23, 0
      %s26 = sadd.s32 %s25, 1
      %s27 = scalar_select %p24, %s25, %s26
      %p30 = pneg %p24
      %p31 = scmp.eq.s32.totalorder %s15, 1
      %p32 = por %p30, %p31
      %p33 = scmp.ne.s32.totalorder %s25, %s28
      %p34 = scmp.eq.s32.totalorder %s15, 0
      %p35 = por %p33, %p34
      %p36 = scmp.ne.s32.totalorder %s25, %s28
      %p37 = scmp.eq.s32.totalorder %s20, 1
      %p38 = por %p36, %p37
      %p39 = scmp.ne.s32.totalorder %s28, %s29
      %p40 = scmp.eq.s32.totalorder %s20, 0
      %p41 = por %p39, %p40
      %p42 = scmp.ne.s32.totalorder %s28, %s29
      %p43 = scmp.eq.s32.totalorder %s21, 1
      %p44 = por %p42, %p43
      %p46 = scmp.ne.s32.totalorder %s29, %s45
      %p47 = scmp.eq.s32.totalorder %s21, 0
      %p48 = por %p46, %p47
      %s50 = sadd.s32 %s49, 1
      %p53 = scmp.eq.s32.totalorder %s15, 1
      %p54 = scmp.ne.s32.totalorder %s49, %s51
      %p55 = scmp.eq.s32.totalorder %s15, 0
      %p56 = por %p54, %p55
      %p57 = scmp.ne.s32.totalorder %s49, %s51
      %p58 = scmp.eq.s32.totalorder %s20, 1
      %p59 = por %p57, %p58
      %p60 = scmp.ne.s32.totalorder %s51, %s52
      %p61 = scmp.eq.s32.totalorder %s20, 0
      %p62 = por %p60, %p61
      %p63 = scmp.ne.s32.totalorder %s51, %s52
      %p64 = scmp.eq.s32.totalorder %s21, 1
      %p65 = por %p63, %p64
      %p67 = scmp.ne.s32.totalorder %s52, %s66
      %p68 = scmp.eq.s32.totalorder %s21, 0
      %p69 = por %p67, %p68
      %s71 = sadd.s32 %s70, 1
      %p74 = scmp.eq.s32.totalorder %s15, 1
      %p75 = scmp.ne.s32.totalorder %s70, %s72
      %p76 = scmp.eq.s32.totalorder %s15, 0
      %p77 = por %p75, %p76
      %p78 = scmp.ne.s32.totalorder %s70, %s72
      %p79 = scmp.eq.s32.totalorder %s20, 1
      %p80 = por %p78, %p79
      %p81 = scmp.ne.s32.totalorder %s72, %s73
      %p82 = scmp.eq.s32.totalorder %s20, 0
      %p83 = por %p81, %p82
      %p84 = scmp.ne.s32.totalorder %s72, %s73
      %p85 = scmp.eq.s32.totalorder %s21, 1
      %p86 = por %p84, %p85
      %p88 = scmp.ne.s32.totalorder %s73, %s87
      %p89 = scmp.eq.s32.totalorder %s21, 0
      %p90 = por %p88, %p89
      %s92 = sadd.s32 %s91, 1
      %p95 = scmp.eq.s32.totalorder %s15, 1
      %p96 = scmp.ne.s32.totalorder %s91, %s93
      %p97 = scmp.eq.s32.totalorder %s15, 0
      %p98 = por %p96, %p97
      %p99 = scmp.ne.s32.totalorder %s91, %s93
      %p100 = scmp.eq.s32.totalorder %s20, 1
      %p101 = por %p99, %p100
      %p102 = scmp.ne.s32.totalorder %s93, %s94
      %p103 = scmp.eq.s32.totalorder %s20, 0
      %p104 = por %p102, %p103
      %p105 = scmp.ne.s32.totalorder %s93, %s94
      %p106 = scmp.eq.s32.totalorder %s21, 1
      %p107 = por %p105, %p106
      %p109 = scmp.ne.s32.totalorder %s94, %s108
      %p110 = scmp.eq.s32.totalorder %s21, 0
      %p111 = por %p109, %p110
      %s113 = sadd.s32 %s112, 1
      %p116 = scmp.eq.s32.totalorder %s15, 1
      %p117 = scmp.ne.s32.totalorder %s112, %s114
      %p118 = scmp.eq.s32.totalorder %s15, 0
      %p119 = por %p117, %p118
      %p120 = scmp.ne.s32.totalorder %s112, %s114
      %p121 = scmp.eq.s32.totalorder %s20, 1
      %p122 = por %p120, %p121
      %p123 = scmp.ne.s32.totalorder %s114, %s115
      %p124 = scmp.eq.s32.totalorder %s20, 0
      %p125 = por %p123, %p124
      %p126 = scmp.ne.s32.totalorder %s114, %s115
      %p127 = scmp.eq.s32.totalorder %s21, 1
      %p128 = por %p126, %p127
      %p130 = scmp.ne.s32.totalorder %s115, %s129
      %p131 = scmp.eq.s32.totalorder %s21, 0
      %p132 = por %p130, %p131
      %s133 = ssub.s32 %s15, %s22
      %p134 = scmp.eq.s32.totalorder %s133, 0
      %s136 = sadd.s32 %s135, 1
      %s137 = scalar_select %p134, %s135, %s136
      %p140 = pneg %p134
      %p141 = scmp.eq.s32.totalorder %s15, 1
      %p142 = por %p140, %p141
      %p143 = scmp.ne.s32.totalorder %s135, %s138
      %p144 = scmp.eq.s32.totalorder %s15, 0
      %p145 = por %p143, %p144
      %p146 = scmp.ne.s32.totalorder %s135, %s138
      %p147 = scmp.eq.s32.totalorder %s20, 1
      %p148 = por %p146, %p147
      %p149 = scmp.ne.s32.totalorder %s138, %s139
      %p150 = scmp.eq.s32.totalorder %s20, 0
      %p151 = por %p149, %p150
      %p152 = scmp.ne.s32.totalorder %s138, %s139
      %p153 = scmp.eq.s32.totalorder %s21, 1
      %p154 = por %p152, %p153
      %p156 = scmp.ne.s32.totalorder %s139, %s155
      %p157 = scmp.eq.s32.totalorder %s21, 0
      %p158 = por %p156, %p157
      %p159 = scmp.le.s32.totalorder 1, %s15
      %p160 = scmp.lt.s32.totalorder %s15, 3
      %p161 = pnand %p159, %p160
      %p162 = pneg %p161
      // Predicated region
      $region9: #{tpu_custom_call.1} parent=5 // pred_check
        _
      $region10: #{tpu_custom_call.1} parent=5 // pred_check_branch
        %164 = sbr.rel (%p161) target = $region12
      $region11: #{tpu_custom_call.1} parent=5 // pred_region
        %s165 = ssub.s32 %s15, 1
        // Predicated region
        $region13: #{tpu_custom_call.1} parent=11 // pred_check
          %p166 = pneg %p62
        $region14: #{tpu_custom_call.1} parent=11 // pred_check_branch
          %168 = sbr.rel (%p166) target = $region16
        $region15: #{tpu_custom_call.1} parent=11 // pred_region
          %s170 = ssub.s32 1280, 1280
          %171 = vsyncadd [#allocation3], %s170
          %s172 = sshll.u32 [#allocation2], 4
          %s173 = int_to_ptr.vmem [resolvable:$true] %s172
          %178 = dma.hbm_to_vmem [thread:$0]  %s1, 1280, %s173, [#allocation3], 64, 64, 4
        $region16: #{tpu_custom_call.1} parent=11 // pred_fallthru
          _
        // Predicated region
        $region17: #{tpu_custom_call.1} parent=11 // pred_check
          %p179 = pneg %p83
        $region18: #{tpu_custom_call.1} parent=11 // pred_check_branch
          %181 = sbr.rel (%p179) target = $region20
        $region19: #{tpu_custom_call.1} parent=11 // pred_region
          _
        $region20: #{tpu_custom_call.1} parent=11 // pred_fallthru
          _
        // Predicated region
        $region21: #{tpu_custom_call.1} parent=11 // pred_check
          %p182 = pneg %p104
        $region22: #{tpu_custom_call.1} parent=11 // pred_check_branch
          %184 = sbr.rel (%p182) target = $region24
        $region23: #{tpu_custom_call.1} parent=11 // pred_region
          _
        $region24: #{tpu_custom_call.1} parent=11 // pred_fallthru
          _
        // Predicated region
        $region25: #{tpu_custom_call.1} parent=11 // pred_check
          %p185 = pneg %p125
        $region26: #{tpu_custom_call.1} parent=11 // pred_check_branch
          %187 = sbr.rel (%p185) target = $region28
        $region27: #{tpu_custom_call.1} parent=11 // pred_region
          _
        $region28: #{tpu_custom_call.1} parent=11 // pred_fallthru
          _
      $region12: #{tpu_custom_call.1} parent=5 // pred_fallthru
        _
      %p188 = scmp.lt.s32.totalorder %s15, 2
      // Predicated region
      $region29: #{tpu_custom_call.1} parent=5 // pred_check
        %p189 = pneg %p188
      $region30: #{tpu_custom_call.1} parent=5 // pred_check_branch
        %191 = sbr.rel (%p189) target = $region32
      $region31: #{tpu_custom_call.1} parent=5 // pred_region
        // Predicated region
        $region33: #{tpu_custom_call.1} parent=31 // pred_check
          %p192 = pneg %p35
        $region34: #{tpu_custom_call.1} parent=31 // pred_check_branch
          %194 = sbr.rel (%p192) target = $region36
        $region35: #{tpu_custom_call.1} parent=31 // pred_region
          %s195 = smul.u32 16, %s15
          %p196 = scmp.lt.s32.totalorder %s195, 31
          %s197 = scalar_select %p196, %s195, 31
          %s198 = smul.addr %s197, 4
          %s199 = scalar_lea.vmem %s0, %s198
          %s200 = smul.u32 16, %s15
        $region36: #{tpu_custom_call.1} parent=31 // pred_fallthru
          _
      $region32: #{tpu_custom_call.1} parent=5 // pred_fallthru
        _
      %p201 = scmp.le.s32.totalorder 1, %s15
      %p202 = scmp.lt.s32.totalorder %s15, 3
      %p203 = pnand %p201, %p202
      %p204 = pneg %p203
      // Predicated region
      $region37: #{tpu_custom_call.1} parent=5 // pred_check
        _
      $region38: #{tpu_custom_call.1} parent=5 // pred_check_branch
        %206 = sbr.rel (%p203) target = $region40
      $region39: #{tpu_custom_call.1} parent=5 // pred_region
        %s207 = ssub.s32 %s15, 1
        // Predicated region
        $region41: #{tpu_custom_call.1} parent=39 // pred_check
          %p208 = pneg %p62
        $region42: #{tpu_custom_call.1} parent=39 // pred_check_branch
          %210 = sbr.rel (%p208) target = $region44
        $region43: #{tpu_custom_call.1} parent=39 // pred_region
          %211 = dma.done [#allocation3], 1280
        $region44: #{tpu_custom_call.1} parent=39 // pred_fallthru
          _
        %s212 = smul.u32 16, %s20
        %p213 = scmp.lt.s32.totalorder %s212, 31
        %s214 = scalar_select %p213, %s212, 31
        %s215 = smul.addr %s214, 4
        %s216 = scalar_lea.vmem %s0, %s215
        %p217 = pneg %p41
        %p218 = pneg %p38
        %p219 = pneg %p62
        %p220 = pneg %p59
        %p221 = pneg %p83
        %p222 = pneg %p80
        %p223 = pneg %p104
        %p224 = pneg %p101
        %p225 = pneg %p125
        %p226 = pneg %p122
        %p227 = pneg %p151
        %p228 = pneg %p148
        %s229 = sand.u32 %s138, 1
        %s230 = scalar_lea.sflag [#allocation4], %s229
        %s231 = sand.u32 %s138, 1
        %s232 = smul.addr %s231, 8
        %s233 = scalar_lea.vmem [#allocation5], %s232
        %s234 = smul.u32 16, %s20
        %p235 = scmp.lt.s32.totalorder %s234, 31
        %s236 = scalar_select %p235, %s234, 31
        %s237 = smul.addr %s236, 4
        %s238 = scalar_lea.vmem %s0, %s237
        %s239 = smul.u32 16, %s20
        %v241 = vld [vmem:[%s238] sm:$0xf]
        %v242 = vld [vmem:[%s238 + $0x4] sm:$0xf]
        %v243 = vld [vmem:[%s238 + $0x8] sm:$0xf]
        %v244 = vld [vmem:[%s238 + $0xc] sm:$0xf]
        %v245 = vld [vmem:[%s238 + $0x10] sm:$0xf]
        %v246 = vld [vmem:[%s238 + $0x14] sm:$0xf]
        %v247 = vld [vmem:[%s238 + $0x18] sm:$0xf]
        %v248 = vld [vmem:[%s238 + $0x1c] sm:$0xf]
        %v249 = vld [vmem:[%s238 + $0x20] sm:$0xf]
        %v250 = vld [vmem:[%s238 + $0x24] sm:$0xf]
        %v251 = vld [vmem:[%s238 + $0x28] sm:$0xf]
        %v252 = vld [vmem:[%s238 + $0x2c] sm:$0xf]
        %v253 = vld [vmem:[%s238 + $0x30] sm:$0xf]
        %v254 = vld [vmem:[%s238 + $0x34] sm:$0xf]
        %v255 = vld [vmem:[%s238 + $0x38] sm:$0xf]
        %v256 = vld [vmem:[%s238 + $0x3c] sm:$0xf]
        %v257 = vunpack.c.l.bf16 %v241
        %v258 = vunpack.c.l.bf16 %v242
        %v259 = vunpack.c.l.bf16 %v243
        %v260 = vunpack.c.l.bf16 %v244
        %v261 = vunpack.c.l.bf16 %v245
        %v262 = vunpack.c.l.bf16 %v246
        %v263 = vunpack.c.l.bf16 %v247
        %v264 = vunpack.c.l.bf16 %v248
        %v265 = vunpack.c.l.bf16 %v249
        %v266 = vunpack.c.l.bf16 %v250
        %v267 = vunpack.c.l.bf16 %v251
        %v268 = vunpack.c.l.bf16 %v252
        %v269 = vunpack.c.l.bf16 %v253
        %v270 = vunpack.c.l.bf16 %v254
        %v271 = vunpack.c.l.bf16 %v255
        %v272 = vunpack.c.l.bf16 %v256
        %v273 = vrot.slane %v257, 1
        %v274 = vrot.slane %v258, 1
        %v275 = vrot.slane %v259, 1
        %v276 = vrot.slane %v260, 1
        %v277 = vrot.slane %v261, 1
        %v278 = vrot.slane %v262, 1
        %v279 = vrot.slane %v263, 1
        %v280 = vrot.slane %v264, 1
        %v281 = vrot.slane %v265, 1
        %v282 = vrot.slane %v266, 1
        %v283 = vrot.slane %v267, 1
        %v284 = vrot.slane %v268, 1
        %v285 = vrot.slane %v269, 1
        %v286 = vrot.slane %v270, 1
        %v287 = vrot.slane %v271, 1
        %v288 = vrot.slane %v272, 1
        %v289 = vlaneseq
        %v290 = vshrl.u32 %v289, 7
        %vm291 = vcmp.lt.s32.totalorder %v290, 7
        %v292 = vsel %vm291, %v287, %v288
        %v293 = vsel %vm291, %v286, %v287
        %v294 = vsel %vm291, %v285, %v286
        %v295 = vsel %vm291, %v284, %v285
        %v296 = vsel %vm291, %v283, %v284
        %v297 = vsel %vm291, %v282, %v283
        %v298 = vsel %vm291, %v281, %v282
        %v299 = vsel %vm291, %v280, %v281
        %v300 = vsel %vm291, %v279, %v280
        %v301 = vsel %vm291, %v278, %v279
        %v302 = vsel %vm291, %v277, %v278
        %v303 = vsel %vm291, %v276, %v277
        %v304 = vsel %vm291, %v275, %v276
        %v305 = vsel %vm291, %v274, %v275
        %v306 = vsel %vm291, %v273, %v274
        %v307 = vsel %vm291, %v288, %v273
        %v308 = vpack.c.bf16 %v305, %v306
        %v309 = vpack.c.bf16 %v303, %v304
        %v310 = vpack.c.bf16 %v301, %v302
        %v311 = vpack.c.bf16 %v299, %v300
        %v312 = vpack.c.bf16 %v297, %v298
        %v313 = vpack.c.bf16 %v295, %v296
        %v314 = vpack.c.bf16 %v293, %v294
        %v315 = vpack.c.bf16 %v307, %v292
        %v316 = vrot.slane %v257, 2
        %v317 = vrot.slane %v258, 2
        %v318 = vrot.slane %v259, 2
        %v319 = vrot.slane %v260, 2
        %v320 = vrot.slane %v261, 2
        %v321 = vrot.slane %v262, 2
        %v322 = vrot.slane %v263, 2
        %v323 = vrot.slane %v264, 2
        %v324 = vrot.slane %v265, 2
        %v325 = vrot.slane %v266, 2
        %v326 = vrot.slane %v267, 2
        %v327 = vrot.slane %v268, 2
        %v328 = vrot.slane %v269, 2
        %v329 = vrot.slane %v270, 2
        %v330 = vrot.slane %v271, 2
        %v331 = vrot.slane %v272, 2
        %vm332 = vcmp.lt.s32.totalorder %v290, 6
        %v333 = vsel %vm332, %v330, %v331
        %v334 = vsel %vm332, %v329, %v330
        %v335 = vsel %vm332, %v328, %v329
        %v336 = vsel %vm332, %v327, %v328
        %v337 = vsel %vm332, %v326, %v327
        %v338 = vsel %vm332, %v325, %v326
        %v339 = vsel %vm332, %v324, %v325
        %v340 = vsel %vm332, %v323, %v324
        %v341 = vsel %vm332, %v322, %v323
        %v342 = vsel %vm332, %v321, %v322
        %v343 = vsel %vm332, %v320, %v321
        %v344 = vsel %vm332, %v319, %v320
        %v345 = vsel %vm332, %v318, %v319
        %v346 = vsel %vm332, %v317, %v318
        %v347 = vsel %vm332, %v316, %v317
        %v348 = vsel %vm332, %v331, %v316
        %v349 = vpack.c.bf16 %v346, %v347
        %v350 = vpack.c.bf16 %v344, %v345
        %v351 = vpack.c.bf16 %v342, %v343
        %v352 = vpack.c.bf16 %v340, %v341
        %v353 = vpack.c.bf16 %v338, %v339
        %v354 = vpack.c.bf16 %v336, %v337
        %v355 = vpack.c.bf16 %v334, %v335
        %v356 = vpack.c.bf16 %v348, %v333
        %v357 = vrot.slane %v257, 3
        %v358 = vrot.slane %v258, 3
        %v359 = vrot.slane %v259, 3
        %v360 = vrot.slane %v260, 3
        %v361 = vrot.slane %v261, 3
        %v362 = vrot.slane %v262, 3
        %v363 = vrot.slane %v263, 3
        %v364 = vrot.slane %v264, 3
        %v365 = vrot.slane %v265, 3
        %v366 = vrot.slane %v266, 3
        %v367 = vrot.slane %v267, 3
        %v368 = vrot.slane %v268, 3
        %v369 = vrot.slane %v269, 3
        %v370 = vrot.slane %v270, 3
        %v371 = vrot.slane %v271, 3
        %v372 = vrot.slane %v272, 3
        %vm373 = vcmp.lt.s32.totalorder %v290, 5
        %v374 = vsel %vm373, %v371, %v372
        %v375 = vsel %vm373, %v370, %v371
        %v376 = vsel %vm373, %v369, %v370
        %v377 = vsel %vm373, %v368, %v369
        %v378 = vsel %vm373, %v367, %v368
        %v379 = vsel %vm373, %v366, %v367
        %v380 = vsel %vm373, %v365, %v366
        %v381 = vsel %vm373, %v364, %v365
        %v382 = vsel %vm373, %v363, %v364
        %v383 = vsel %vm373, %v362, %v363
        %v384 = vsel %vm373, %v361, %v362
        %v385 = vsel %vm373, %v360, %v361
        %v386 = vsel %vm373, %v359, %v360
        %v387 = vsel %vm373, %v358, %v359
        %v388 = vsel %vm373, %v357, %v358
        %v389 = vsel %vm373, %v372, %v357
        %v390 = vpack.c.bf16 %v387, %v388
        %v391 = vpack.c.bf16 %v385, %v386
        %v392 = vpack.c.bf16 %v383, %v384
        %v393 = vpack.c.bf16 %v381, %v382
        %v394 = vpack.c.bf16 %v379, %v380
        %v395 = vpack.c.bf16 %v377, %v378
        %v396 = vpack.c.bf16 %v375, %v376
        %v397 = vpack.c.bf16 %v389, %v374
        %v398 = vrot.slane %v257, 4
        %v399 = vrot.slane %v258, 4
        %v400 = vrot.slane %v259, 4
        %v401 = vrot.slane %v260, 4
        %v402 = vrot.slane %v261, 4
        %v403 = vrot.slane %v262, 4
        %v404 = vrot.slane %v263, 4
        %v405 = vrot.slane %v264, 4
        %v406 = vrot.slane %v265, 4
        %v407 = vrot.slane %v266, 4
        %v408 = vrot.slane %v267, 4
        %v409 = vrot.slane %v268, 4
        %v410 = vrot.slane %v269, 4
        %v411 = vrot.slane %v270, 4
        %v412 = vrot.slane %v271, 4
        %v413 = vrot.slane %v272, 4
        %vm414 = vcmp.lt.s32.totalorder %v290, 4
        %v415 = vsel %vm414, %v412, %v413
        %v416 = vsel %vm414, %v411, %v412
        %v417 = vsel %vm414, %v410, %v411
        %v418 = vsel %vm414, %v409, %v410
        %v419 = vsel %vm414, %v408, %v409
        %v420 = vsel %vm414, %v407, %v408
        %v421 = vsel %vm414, %v406, %v407
        %v422 = vsel %vm414, %v405, %v406
        %v423 = vsel %vm414, %v404, %v405
        %v424 = vsel %vm414, %v403, %v404
        %v425 = vsel %vm414, %v402, %v403
        %v426 = vsel %vm414, %v401, %v402
        %v427 = vsel %vm414, %v400, %v401
        %v428 = vsel %vm414, %v399, %v400
        %v429 = vsel %vm414, %v398, %v399
        %v430 = vsel %vm414, %v413, %v398
        %v431 = vpack.c.bf16 %v428, %v429
        %v432 = vpack.c.bf16 %v426, %v427
        %v433 = vpack.c.bf16 %v424, %v425
        %v434 = vpack.c.bf16 %v422, %v423
        %v435 = vpack.c.bf16 %v420, %v421
        %v436 = vpack.c.bf16 %v418, %v419
        %v437 = vpack.c.bf16 %v416, %v417
        %v438 = vpack.c.bf16 %v430, %v415
        %v455 = vunpack.c.l.b16 %v241
        %v456 = vunpack.c.l.b16 %v242
        %v457 = vunpack.c.l.b16 %v243
        %v458 = vunpack.c.l.b16 %v244
        %v459 = vunpack.c.l.b16 %v245
        %v460 = vunpack.c.l.b16 %v246
        %v461 = vunpack.c.l.b16 %v247
        %v462 = vunpack.c.l.b16 %v248
        %v463 = vunpack.c.l.b16 %v249
        %v464 = vunpack.c.l.b16 %v250
        %v465 = vunpack.c.l.b16 %v251
        %v466 = vunpack.c.l.b16 %v252
        %v467 = vunpack.c.l.b16 %v253
        %v468 = vunpack.c.l.b16 %v254
        %v469 = vunpack.c.l.b16 %v255
        %v470 = vunpack.c.l.b16 %v256
        %v471 = vpack.c.b16 %v456, %v455
        %v472 = vpack.c.b16 %v458, %v457
        %v473 = vpack.c.b16 %v460, %v459
        %v474 = vpack.c.b16 %v462, %v461
        %v475 = vpack.c.b16 %v464, %v463
        %v476 = vpack.c.b16 %v466, %v465
        %v477 = vpack.c.b16 %v468, %v467
        %v478 = vpack.c.b16 %v470, %v469
        %487 = vrot.lane.b32.xlu0 %v308, 32
        %v488 = vpop.permute.xlu0 %487
        %489 = vrot.lane.b32.xlu0 %v309, 32
        %v490 = vpop.permute.xlu0 %489
        %491 = vrot.lane.b32.xlu0 %v310, 32
        %v492 = vpop.permute.xlu0 %491
        %493 = vrot.lane.b32.xlu0 %v311, 32
        %v494 = vpop.permute.xlu0 %493
        %495 = vrot.lane.b32.xlu0 %v312, 32
        %v496 = vpop.permute.xlu0 %495
        %497 = vrot.lane.b32.xlu0 %v313, 32
        %v498 = vpop.permute.xlu0 %497
        %499 = vrot.lane.b32.xlu0 %v314, 32
        %v500 = vpop.permute.xlu0 %499
        %501 = vrot.lane.b32.xlu0 %v315, 32
        %v502 = vpop.permute.xlu0 %501
        %511 = vrot.lane.b32.xlu0 %v349, 64
        %v512 = vpop.permute.xlu0 %511
        %513 = vrot.lane.b32.xlu0 %v350, 64
        %v514 = vpop.permute.xlu0 %513
        %515 = vrot.lane.b32.xlu0 %v351, 64
        %v516 = vpop.permute.xlu0 %515
        %517 = vrot.lane.b32.xlu0 %v352, 64
        %v518 = vpop.permute.xlu0 %517
        %519 = vrot.lane.b32.xlu0 %v353, 64
        %v520 = vpop.permute.xlu0 %519
        %521 = vrot.lane.b32.xlu0 %v354, 64
        %v522 = vpop.permute.xlu0 %521
        %523 = vrot.lane.b32.xlu0 %v355, 64
        %v524 = vpop.permute.xlu0 %523
        %525 = vrot.lane.b32.xlu0 %v356, 64
        %v526 = vpop.permute.xlu0 %525
        %535 = vrot.lane.b32.xlu0 %v390, 96
        %v536 = vpop.permute.xlu0 %535
        %537 = vrot.lane.b32.xlu0 %v391, 96
        %v538 = vpop.permute.xlu0 %537
        %539 = vrot.lane.b32.xlu0 %v392, 96
        %v540 = vpop.permute.xlu0 %539
        %541 = vrot.lane.b32.xlu0 %v393, 96
        %v542 = vpop.permute.xlu0 %541
        %543 = vrot.lane.b32.xlu0 %v394, 96
        %v544 = vpop.permute.xlu0 %543
        %545 = vrot.lane.b32.xlu0 %v395, 96
        %v546 = vpop.permute.xlu0 %545
        %547 = vrot.lane.b32.xlu0 %v396, 96
        %v548 = vpop.permute.xlu0 %547
        %549 = vrot.lane.b32.xlu0 %v397, 96
        %v550 = vpop.permute.xlu0 %549
        %vm551 = vcmask 261120
        %v554 = vsel %vm551, %v471, %v488
        %v557 = vsel %vm551, %v472, %v490
        %v560 = vsel %vm551, %v473, %v492
        %v563 = vsel %vm551, %v474, %v494
        %v566 = vsel %vm551, %v475, %v496
        %v569 = vsel %vm551, %v476, %v498
        %v572 = vsel %vm551, %v477, %v500
        %v575 = vsel %vm551, %v478, %v502
        %vm576 = vcmask 523264
        %v578 = vsel %vm576, %v554, %v512
        %v580 = vsel %vm576, %v557, %v514
        %v582 = vsel %vm576, %v560, %v516
        %v584 = vsel %vm576, %v563, %v518
        %v586 = vsel %vm576, %v566, %v520
        %v588 = vsel %vm576, %v569, %v522
        %v590 = vsel %vm576, %v572, %v524
        %v592 = vsel %vm576, %v575, %v526
        %vm593 = vcmask 785408
        %v595 = vsel %vm593, %v578, %v536
        %v598 = vsel %vm593, %v580, %v538
        %v601 = vsel %vm593, %v582, %v540
        %v604 = vsel %vm593, %v584, %v542
        %v607 = vsel %vm593, %v586, %v544
        %v610 = vsel %vm593, %v588, %v546
        %v613 = vsel %vm593, %v590, %v548
        %v616 = vsel %vm593, %v592, %v550
        %v618 = vld [vmem:[#allocation2] sm:$0xf]
        %v619 = vld [vmem:[#allocation2 + $0x4] sm:$0xf]
        %v620 = vld [vmem:[#allocation2 + $0x8] sm:$0xf]
        %v621 = vld [vmem:[#allocation2 + $0xc] sm:$0xf]
        %v622 = vld [vmem:[#allocation2 + $0x10] sm:$0xf]
        %v623 = vld [vmem:[#allocation2 + $0x14] sm:$0xf]
        %v624 = vld [vmem:[#allocation2 + $0x18] sm:$0xf]
        %v625 = vld [vmem:[#allocation2 + $0x1c] sm:$0xf]
        %v626 = vld [vmem:[#allocation2 + $0x20] sm:$0xf]
        %v627 = vld [vmem:[#allocation2 + $0x24] sm:$0xf]
        %v628 = vld [vmem:[#allocation2 + $0x28] sm:$0xf]
        %v629 = vld [vmem:[#allocation2 + $0x2c] sm:$0xf]
        %v630 = vld [vmem:[#allocation2 + $0x30] sm:$0xf]
        %v631 = vld [vmem:[#allocation2 + $0x34] sm:$0xf]
        %v632 = vld [vmem:[#allocation2 + $0x38] sm:$0xf]
        %v633 = vld [vmem:[#allocation2 + $0x3c] sm:$0xf]
        %v634 = vld [vmem:[#allocation2 + $0x40] sm:$0xf]
        %v635 = vld [vmem:[#allocation2 + $0x44] sm:$0xf]
        %v636 = vld [vmem:[#allocation2 + $0x48] sm:$0xf]
        %v637 = vld [vmem:[#allocation2 + $0x4c] sm:$0xf]
        %v658 = vunpack.c.l.b16 %v618
        %v659 = vunpack.c.l.b16 %v619
        %v660 = vunpack.c.l.b16 %v620
        %v661 = vunpack.c.l.b16 %v621
        %v662 = vunpack.c.l.b16 %v622
        %v663 = vunpack.c.l.b16 %v623
        %v664 = vunpack.c.l.b16 %v624
        %v665 = vunpack.c.l.b16 %v625
        %v666 = vunpack.c.l.b16 %v626
        %v667 = vunpack.c.l.b16 %v627
        %v668 = vunpack.c.l.b16 %v628
        %v669 = vunpack.c.l.b16 %v629
        %v670 = vunpack.c.l.b16 %v630
        %v671 = vunpack.c.l.b16 %v631
        %v672 = vunpack.c.l.b16 %v632
        %v673 = vunpack.c.l.b16 %v633
        %v674 = vunpack.c.l.b16 %v634
        %v675 = vunpack.c.l.b16 %v635
        %v676 = vunpack.c.l.b16 %v636
        %v677 = vunpack.c.l.b16 %v637
        %v678 = vpack.c.b16 %v659, %v658
        %v679 = vpack.c.b16 %v661, %v660
        %v680 = vpack.c.b16 %v663, %v662
        %v681 = vpack.c.b16 %v665, %v664
        %v682 = vpack.c.b16 %v667, %v666
        %v683 = vpack.c.b16 %v669, %v668
        %v684 = vpack.c.b16 %v671, %v670
        %v685 = vpack.c.b16 %v673, %v672
        %v686 = vpack.c.b16 %v675, %v674
        %v687 = vpack.c.b16 %v677, %v676
        %v699 = vsel %vm551, %v431, 0
        %v702 = vsel %vm551, %v432, 0
        %v705 = vsel %vm551, %v433, 0
        %v708 = vsel %vm551, %v434, 0
        %v711 = vsel %vm551, %v435, 0
        %v714 = vsel %vm551, %v436, 0
        %v717 = vsel %vm551, %v437, 0
        %v720 = vsel %vm551, %v438, 0
        %722 = vmatprep.subr.bf16.mxu0 0
        %723 = vmatpush1.bf16.msra.mxu0 %v678
        %724 = vmatprep.subr.bf16.mxu0 0
        %725 = vmatpush1.bf16.msra.mxu0 %v679
        %726 = vmatprep.subr.bf16.mxu0 0
        %727 = vmatpush1.bf16.msra.mxu0 %v680
        %728 = vmatprep.subr.bf16.mxu0 0
        %729 = vmatpush1.bf16.msra.mxu0 %v681
        %730 = vmatprep.subr.bf16.mxu0 0
        %731 = vmatpush1.bf16.msra.mxu0 %v682
        %732 = vmatprep.subr.bf16.mxu0 0
        %733 = vmatpush1.bf16.msra.mxu0 %v683
        %734 = vmatprep.subr.bf16.mxu0 0
        %735 = vmatpush1.bf16.msra.mxu0 %v684
        %736 = vmatprep.subr.bf16.mxu0 0
        %737 = vmatpush1.bf16.msra.mxu0 %v685
        %738 = vmatprep.subr.bf16.mxu0 0
        %739 = vmatpush1.bf16.msra.mxu0 %v686
        %740 = vmatprep.subr.bf16.mxu0 0
        %741 = vmatpush1.bf16.msra.mxu0 %v687
        %742 = vmatprep.subr.bf16.mxu0 0
        %743 = vmatpush1.bf16.msra.mxu0 0
        %744 = vmatprep.subr.bf16.mxu0 0
        %745 = vmatpush1.bf16.msra.mxu0 0
        %746 = vmatprep.subr.bf16.mxu0 0
        %747 = vmatpush1.bf16.msra.mxu0 0
        %748 = vmatprep.subr.bf16.mxu0 0
        %749 = vmatpush1.bf16.msra.mxu0 0
        %750 = vmatprep.subr.bf16.mxu0 0
        %751 = vmatpush1.bf16.msra.mxu0 0
        %752 = vmatprep.subr.bf16.mxu0 0
        %753 = vmatpush1.bf16.msra.mxu0 0
        %754 = vmatprep.mubr.bf16.mxu0 %v699
        %755 = vmatmul.mubr.bf16.gmra.mrb[0].mxu0 %v595
        %v756 = vpop.f32.mrb[0].mxu0
        %v757 = vadd.f32 0.0, %v756
        %v758 = vpop.f32.mrb[0].mxu0
        %v759 = vpop.f32.mrb[0].mxu0
        %v760 = vadd.f32 0.0, %v759
        %v761 = vpop.f32.mrb[0].mxu0
        %762 = vmatprep.mubr.bf16.mxu0 %v702
        %763 = vmatmul.mubr.bf16.gmra.mrb[0].mxu0 %v598
        %v764 = vpop.f32.mrb[0].mxu0
        %v765 = vadd.f32 0.0, %v764
        %v766 = vpop.f32.mrb[0].mxu0
        %v767 = vpop.f32.mrb[0].mxu0
        %v768 = vadd.f32 0.0, %v767
        %v769 = vpop.f32.mrb[0].mxu0
        %770 = vmatprep.mubr.bf16.mxu0 %v705
        %771 = vmatmul.mubr.bf16.gmra.mrb[0].mxu0 %v601
        %v772 = vpop.f32.mrb[0].mxu0
        %v773 = vadd.f32 0.0, %v772
        %v774 = vpop.f32.mrb[0].mxu0
        %v775 = vpop.f32.mrb[0].mxu0
        %v776 = vadd.f32 0.0, %v775
        %v777 = vpop.f32.mrb[0].mxu0
        %778 = vmatprep.mubr.bf16.mxu0 %v708
        %779 = vmatmul.mubr.bf16.gmra.mrb[0].mxu0 %v604
        %v780 = vpop.f32.mrb[0].mxu0
        %v781 = vadd.f32 0.0, %v780
        %v782 = vpop.f32.mrb[0].mxu0
        %v783 = vpop.f32.mrb[0].mxu0
        %v784 = vadd.f32 0.0, %v783
        %v785 = vpop.f32.mrb[0].mxu0
        %786 = vmatprep.mubr.bf16.mxu0 %v711
        %787 = vmatmul.mubr.bf16.gmra.mrb[0].mxu0 %v607
        %v788 = vpop.f32.mrb[0].mxu0
        %v789 = vadd.f32 0.0, %v788
        %v790 = vpop.f32.mrb[0].mxu0
        %v791 = vpop.f32.mrb[0].mxu0
        %v792 = vadd.f32 0.0, %v791
        %v793 = vpop.f32.mrb[0].mxu0
        %794 = vmatprep.mubr.bf16.mxu0 %v714
        %795 = vmatmul.mubr.bf16.gmra.mrb[0].mxu0 %v610
        %v796 = vpop.f32.mrb[0].mxu0
        %v797 = vadd.f32 0.0, %v796
        %v798 = vpop.f32.mrb[0].mxu0
        %v799 = vpop.f32.mrb[0].mxu0
        %v800 = vadd.f32 0.0, %v799
        %v801 = vpop.f32.mrb[0].mxu0
        %802 = vmatprep.mubr.bf16.mxu0 %v717
        %803 = vmatmul.mubr.bf16.gmra.mrb[0].mxu0 %v613
        %v804 = vpop.f32.mrb[0].mxu0
        %v805 = vadd.f32 0.0, %v804
        %v806 = vpop.f32.mrb[0].mxu0
        %v807 = vpop.f32.mrb[0].mxu0
        %v808 = vadd.f32 0.0, %v807
        %v809 = vpop.f32.mrb[0].mxu0
        %810 = vmatprep.mubr.bf16.mxu0 %v720
        %811 = vmatmul.mubr.bf16.gmra.mrb[0].mxu0 %v616
        %v812 = vpop.f32.mrb[0].mxu0
        %v813 = vadd.f32 0.0, %v812
        %v814 = vpop.f32.mrb[0].mxu0
        %v815 = vpop.f32.mrb[0].mxu0
        %v816 = vadd.f32 0.0, %v815
        %v817 = vpop.f32.mrb[0].mxu0
        %818 = vdwg.mxu0
        %v819 = vld [vmem:[%s2] sm:$0xff]
        %v820 = vld [vmem:[%s2 + $0x8] sm:$0xff]
        %v821 = vadd.f32 %v757, %v819
        %v822 = vadd.f32 %v760, %v820
        %v823 = vadd.f32 %v765, %v819
        %v824 = vadd.f32 %v768, %v820
        %v825 = vadd.f32 %v773, %v819
        %v826 = vadd.f32 %v776, %v820
        %v827 = vadd.f32 %v781, %v819
        %v828 = vadd.f32 %v784, %v820
        %v829 = vadd.f32 %v789, %v819
        %v830 = vadd.f32 %v792, %v820
        %v831 = vadd.f32 %v797, %v819
        %v832 = vadd.f32 %v800, %v820
        %v833 = vadd.f32 %v805, %v819
        %v834 = vadd.f32 %v808, %v820
        %v835 = vadd.f32 %v813, %v819
        %v836 = vadd.f32 %v816, %v820
        %v837 = vmax.f32 %v821, 0.0
        %v838 = vmax.f32 %v822, 0.0
        %v839 = vmax.f32 %v823, 0.0
        %v840 = vmax.f32 %v824, 0.0
        %v841 = vmax.f32 %v825, 0.0
        %v842 = vmax.f32 %v826, 0.0
        %v843 = vmax.f32 %v827, 0.0
        %v844 = vmax.f32 %v828, 0.0
        %v845 = vmax.f32 %v829, 0.0
        %v846 = vmax.f32 %v830, 0.0
        %v847 = vmax.f32 %v831, 0.0
        %v848 = vmax.f32 %v832, 0.0
        %v849 = vmax.f32 %v833, 0.0
        %v850 = vmax.f32 %v834, 0.0
        %v851 = vmax.f32 %v835, 0.0
        %v852 = vmax.f32 %v836, 0.0
        %v853 = vsel %vm593, %v837, -inf
        %v854 = vsel %vm593, %v838, -inf
        %v855 = vmax.f32 %v853, %v854
        %v856 = vrot.slane %v855, 4
        %v857 = vmax.f32 %v855, %v856
        %v858 = vrot.slane %v857, 2
        %v859 = vmax.f32 %v857, %v858
        %v860 = vrot.slane %v859, 1
        %v861 = vmax.f32 %v859, %v860
        %v862 = vsel %vm593, %v839, -inf
        %v863 = vsel %vm593, %v840, -inf
        %v864 = vmax.f32 %v862, %v863
        %v865 = vrot.slane %v864, 4
        %v866 = vmax.f32 %v864, %v865
        %v867 = vrot.slane %v866, 2
        %v868 = vmax.f32 %v866, %v867
        %v869 = vrot.slane %v868, 1
        %v870 = vmax.f32 %v868, %v869
        %v871 = vsel %vm593, %v841, -inf
        %v872 = vsel %vm593, %v842, -inf
        %v873 = vmax.f32 %v871, %v872
        %v874 = vrot.slane %v873, 4
        %v875 = vmax.f32 %v873, %v874
        %v876 = vrot.slane %v875, 2
        %v877 = vmax.f32 %v875, %v876
        %v878 = vrot.slane %v877, 1
        %v879 = vmax.f32 %v877, %v878
        %v880 = vsel %vm593, %v843, -inf
        %v881 = vsel %vm593, %v844, -inf
        %v882 = vmax.f32 %v880, %v881
        %v883 = vrot.slane %v882, 4
        %v884 = vmax.f32 %v882, %v883
        %v885 = vrot.slane %v884, 2
        %v886 = vmax.f32 %v884, %v885
        %v887 = vrot.slane %v886, 1
        %v888 = vmax.f32 %v886, %v887
        %v889 = vsel %vm593, %v845, -inf
        %v890 = vsel %vm593, %v846, -inf
        %v891 = vmax.f32 %v889, %v890
        %v892 = vrot.slane %v891, 4
        %v893 = vmax.f32 %v891, %v892
        %v894 = vrot.slane %v893, 2
        %v895 = vmax.f32 %v893, %v894
        %v896 = vrot.slane %v895, 1
        %v897 = vmax.f32 %v895, %v896
        %v898 = vsel %vm593, %v847, -inf
        %v899 = vsel %vm593, %v848, -inf
        %v900 = vmax.f32 %v898, %v899
        %v901 = vrot.slane %v900, 4
        %v902 = vmax.f32 %v900, %v901
        %v903 = vrot.slane %v902, 2
        %v904 = vmax.f32 %v902, %v903
        %v905 = vrot.slane %v904, 1
        %v906 = vmax.f32 %v904, %v905
        %v907 = vsel %vm593, %v849, -inf
        %v908 = vsel %vm593, %v850, -inf
        %v909 = vmax.f32 %v907, %v908
        %v910 = vrot.slane %v909, 4
        %v911 = vmax.f32 %v909, %v910
        %v912 = vrot.slane %v911, 2
        %v913 = vmax.f32 %v911, %v912
        %v914 = vrot.slane %v913, 1
        %v915 = vmax.f32 %v913, %v914
        %v916 = vsel %vm593, %v851, -inf
        %v917 = vsel %vm593, %v852, -inf
        %v918 = vmax.f32 %v916, %v917
        %v919 = vrot.slane %v918, 4
        %v920 = vmax.f32 %v918, %v919
        %v921 = vrot.slane %v920, 2
        %v922 = vmax.f32 %v920, %v921
        %v923 = vrot.slane %v922, 1
        %v924 = vmax.f32 %v922, %v923
        %v925 = vld [vmem:[%s3] sm:$0xff]
        %v926 = vld [vmem:[%s3 + $0x8] sm:$0xff]
        %v927 = vld [vmem:[%s3 + $0x10] sm:$0xff]
        %v928 = vld [vmem:[%s3 + $0x18] sm:$0xff]
        %v929 = vld [vmem:[%s3 + $0x20] sm:$0xff]
        %v930 = vld [vmem:[%s3 + $0x28] sm:$0xff]
        %v931 = vld [vmem:[%s3 + $0x30] sm:$0xff]
        %v932 = vld [vmem:[%s3 + $0x38] sm:$0xff]
        %v933 = vld [vmem:[%s3 + $0x40] sm:$0xff]
        %v934 = vld [vmem:[%s3 + $0x48] sm:$0xff]
        %v935 = vld [vmem:[%s3 + $0x50] sm:$0xff]
        %v936 = vld [vmem:[%s3 + $0x58] sm:$0xff]
        %v937 = vld [vmem:[%s4] sm:$0x1]
        %v939 = vlaneseq
        %v940 = vshrl.u32 %v939, 7
        %v941 = vsub.s32 0, %v940
        %v942 = vrot.slane %v937, %v941
        %vm952 = vcmask 1041409
        %v953 = vsel %vm952, %v870, %v861
        %vm954 = vcmask 1042434
        %v955 = vsel %vm954, %v879, %v953
        %vm956 = vcmask 1043459
        %v957 = vsel %vm956, %v888, %v955
        %vm958 = vcmask 1044484
        %v959 = vsel %vm958, %v897, %v957
        %vm960 = vcmask 1045509
        %v961 = vsel %vm960, %v906, %v959
        %vm962 = vcmask 1046534
        %v963 = vsel %vm962, %v915, %v961
        %vm964 = vcmask 1047559
        %v965 = vsel %vm964, %v924, %v963
        %v966 = vsel %vm593, %v965, 0
        %968 = vmatprep.subr.mxu0 0.0
        %969 = vmatpush1.msra.mxu0 %v925
        %970 = vmatprep.subr.mxu0 0.0
        %971 = vmatpush1.msra.mxu0 %v926
        %972 = vmatprep.subr.mxu0 0.0
        %973 = vmatpush1.msra.mxu0 %v927
        %974 = vmatprep.subr.mxu0 0.0
        %975 = vmatpush1.msra.mxu0 %v928
        %976 = vmatprep.subr.mxu0 0.0
        %977 = vmatpush1.msra.mxu0 %v929
        %978 = vmatprep.subr.mxu0 0.0
        %979 = vmatpush1.msra.mxu0 %v930
        %980 = vmatprep.subr.mxu0 0.0
        %981 = vmatpush1.msra.mxu0 %v931
        %982 = vmatprep.subr.mxu0 0.0
        %983 = vmatpush1.msra.mxu0 %v932
        %984 = vmatprep.subr.mxu0 0.0
        %985 = vmatpush1.msra.mxu0 %v933
        %986 = vmatprep.subr.mxu0 0.0
        %987 = vmatpush1.msra.mxu0 %v934
        %988 = vmatprep.subr.mxu0 0.0
        %989 = vmatpush1.msra.mxu0 %v935
        %990 = vmatprep.subr.mxu0 0.0
        %991 = vmatpush1.msra.mxu0 %v936
        %992 = vmatprep.subr.mxu0 0.0
        %993 = vmatpush1.msra.mxu0 0.0
        %994 = vmatprep.subr.mxu0 0.0
        %995 = vmatpush1.msra.mxu0 0.0
        %996 = vmatprep.subr.mxu0 0.0
        %997 = vmatpush1.msra.mxu0 0.0
        %998 = vmatprep.subr.mxu0 0.0
        %999 = vmatpush1.msra.mxu0 0.0
        %1000 = vmatprep.subr.mxu0 0.0
        %1001 = vmatpush1.msra.mxu0 0.0
        %1002 = vmatprep.subr.mxu0 0.0
        %1003 = vmatpush1.msra.mxu0 0.0
        %1004 = vmatprep.subr.mxu0 0.0
        %1005 = vmatpush1.msra.mxu0 0.0
        %1006 = vmatprep.subr.mxu0 0.0
        %1007 = vmatpush1.msra.mxu0 0.0
        %1008 = vmatprep.subr.mxu0 0.0
        %1009 = vmatpush1.msra.mxu0 0.0
        %1010 = vmatprep.subr.mxu0 0.0
        %1011 = vmatpush1.msra.mxu0 0.0
        %1012 = vmatprep.subr.mxu0 0.0
        %1013 = vmatpush1.msra.mxu0 0.0
        %1014 = vmatprep.subr.mxu0 0.0
        %1015 = vmatpush1.msra.mxu0 0.0
        %1016 = vmatprep.subr.mxu0 0.0
        %1017 = vmatpush1.msra.mxu0 0.0
        %1018 = vmatprep.subr.mxu0 0.0
        %1019 = vmatpush1.msra.mxu0 0.0
        %1020 = vmatprep.subr.mxu0 0.0
        %1021 = vmatpush1.msra.mxu0 0.0
        %1022 = vmatprep.subr.mxu0 0.0
        %1023 = vmatpush1.msra.mxu0 0.0
        %1024 = vmatprep.subr.mxu0 0.0
        %1025 = vmatpush1.msra.mxu0 0.0
        %1026 = vmatprep.subr.mxu0 0.0
        %1027 = vmatpush1.msra.mxu0 0.0
        %1028 = vmatprep.subr.mxu0 0.0
        %1029 = vmatpush1.msra.mxu0 0.0
        %1030 = vmatprep.subr.mxu0 0.0
        %1031 = vmatpush1.msra.mxu0 0.0
        %1032 = vmatprep.mubr.f32.mxu0 0.0
        %1033 = vmatmul.mubr.f32.gmra.mrb[0].mxu0 %v966
        %v1034 = vpop.f32.mrb[0].mxu0
        %v1035 = vadd.f32 %v942, %v1034
        %v1036 = vpop.f32.mrb[0].mxu0
        %1037 = vdwg.mxu0
        %1038 = vst [vmem:[%s233] sm:$0xff] %v1035
        %s1039 = sand.u32 %s138, 1
        %s1040 = scalar_lea.sflag [#allocation4], %s1039
        %s1041 = sand.u32 %s138, 1
        %s1042 = smul.addr %s1041, 8
        %s1043 = scalar_lea.vmem [#allocation5], %s1042
        // Predicated region
        $region45: #{tpu_custom_call.1} parent=39 // pred_check
          %p1044 = pneg %p148
        $region46: #{tpu_custom_call.1} parent=39 // pred_check_branch
          %1046 = sbr.rel (%p1044) target = $region48
        $region47: #{tpu_custom_call.1} parent=39 // pred_region
          %s1048 = ssub.s32 128, 128
          %1049 = vsyncadd %s1040, %s1048
          %s1050 = smul.addr %s20, 128
          %s1051 = scalar_lea.hbm %s5, %s1050
          %s1053 = sshll.u32 %s1043, 4
          %s1054 = int_to_ptr.vmem [resolvable:$true] %s1053
          %1056 = dma.vmem_to_hbm [thread:$0]  %s1054, 128, %s1051, %s1040
        $region48: #{tpu_custom_call.1} parent=39 // pred_fallthru
          _
      $region40: #{tpu_custom_call.1} parent=5 // pred_fallthru
        _
      %p1057 = scmp.le.s32.totalorder 2, %s15
      // Predicated region
      $region49: #{tpu_custom_call.1} parent=5 // pred_check
        %p1058 = pneg %p1057
      $region50: #{tpu_custom_call.1} parent=5 // pred_check_branch
        %1060 = sbr.rel (%p1058) target = $region52
      $region51: #{tpu_custom_call.1} parent=5 // pred_region
        %s1061 = ssub.s32 %s15, 2
        // Predicated region
        $region53: #{tpu_custom_call.1} parent=51 // pred_check
          %p1062 = pneg %p154
        $region54: #{tpu_custom_call.1} parent=51 // pred_check_branch
          %1064 = sbr.rel (%p1062) target = $region56
        $region55: #{tpu_custom_call.1} parent=51 // pred_region
          %s1065 = sand.u32 %s139, 1
          %s1066 = scalar_lea.sflag [#allocation4], %s1065
          %s1067 = sand.u32 %s139, 1
          %s1068 = smul.addr %s1067, 8
          %s1069 = scalar_lea.vmem [#allocation5], %s1068
          %1070 = dma.done %s1066, 128
        $region56: #{tpu_custom_call.1} parent=51 // pred_fallthru
          _
      $region52: #{tpu_custom_call.1} parent=5 // pred_fallthru
        _
    $region6: #{tpu_custom_call.1} parent=1 // loop_footer
      %s19 = sadd.s32 1, %s15
    $region7: #{tpu_custom_call.1} parent=1 // loop_footer_branch
      %14 = sbr.rel target = $region3
    $region8: #{tpu_custom_call.1} parent=1 // loop_exit
      _
    %1071 = vsyncpa [#allocation3], 1
    %s1072 = scalar_lea.sflag [#allocation3], 1
    %1073 = vsyncpa %s1072, 1
    %1074 = vsyncpa [#allocation4], 1
    %s1075 = scalar_lea.sflag [#allocation4], 1
    %1076 = vsyncpa %s1075, 1

</llo_original>
